<compile_context>
chip_gen: v7x
topology: tpu7x:2x2x1
jax: 0.10.0
libtpu: 0.0.40
codegen_flags: <defaults>
</compile_context>

<pallas_src>
import functools

import jax
import jax.numpy as jnp
from jax.experimental import pallas as pl
from jax.experimental.pallas import tpu as pltpu


def _round_up(x: int, m: int) -> int:
    return (x + m - 1) // m * m


def _skce_kernel(pp_ref, ww_ref, yy_ref, out_ref, acc_ref, *,
                 n_pairs: int, n_pred: int, n_cls: int, bw: float, use_square: bool):
    # pp_ref : (2, M, C, TL) float — [even/odd, predictor, class, pair-lane]
    # ww_ref : (2, M, 1, TL) float
    # yy_ref : (2, 1, TL)    int32
    # out_ref: (1, 1) f32 ; acc_ref: (1, TL) f32 — lane-wide running partial sums of h
    i = pl.program_id(0)
    tl = pp_ref.shape[-1]
    M, C = n_pred, n_cls

    @pl.when(i == 0)
    def _init():
        acc_ref[...] = jnp.zeros_like(acc_ref)

    pp = pp_ref[...].astype(jnp.float32)     # (2, M, C, TL)
    ww = ww_ref[...].astype(jnp.float32)     # (2, M, 1, TL)
    yy = yy_ref[...]                         # (2, 1, TL) int32

    # calculate_pbar: weighted mixture over M predictors.  Static unroll of full-width
    # VPU multiply/adds; (2,1,TL) -> (2,C,TL) is a sublane broadcast (no lane slicing).
    pbar = ww[:, 0] * pp[:, 0]               # (2, C, TL)
    for m in range(1, M):
        pbar = pbar + ww[:, m] * pp[:, m]

    # one-hot labels, (2, C, TL): single full-width compare against a sublane iota.
    cls = jax.lax.broadcasted_iota(jnp.int32, (2, C, tl), 1)
    oh = (cls == yy).astype(jnp.float32)

    # tv_distance, kernel value and SKCE_ul statistic h — all lane-dense (1, TL) rows.
    d = 0.5 * jnp.sum(jnp.abs(pbar[0] - pbar[1]), axis=0, keepdims=True)   # (1, TL)
    kern = jnp.exp(d * (-1.0 / bw))                                        # (1, TL)
    resid = oh - pbar                                                      # (2, C, TL)
    inner = jnp.sum(resid[0] * resid[1], axis=0, keepdims=True)            # (1, TL)
    h = kern * inner                                                       # (1, TL)

    # Ragged last block: select (not multiply) so garbage lanes can't poison the sum.
    col = i * tl + jax.lax.broadcasted_iota(jnp.int32, (1, tl), 1)
    h = jnp.where(col < n_pairs, h, 0.0)

    acc_ref[...] += h                        # elementwise, full lane width; no per-step reduce

    @pl.when(i == pl.num_programs(0) - 1)
    def _finalize():
        loss = jnp.sum(acc_ref[...], axis=1, keepdims=True) * (1.0 / n_pairs)  # (1, 1)
        if use_square:
            loss = loss * loss
        out_ref[...] = loss


def skce_loss(p_preds, weights_l, y, *, bw: float = 2.0, use_square: bool = True,
              lambda_bce: float = 0.0, tile_lanes: int | None = None):
    """Pallas implementation of SKCELoss.forward.

    p_preds:   (N, M, C) float — probabilistic predictions
    weights_l: (N, M)    float — ensemble weight coefficients
    y:         (N,)      int   — labels
    """
    if lambda_bce > 0.0:
        # TODO(synk): BCE/NLL regularizer (compute_reg_loss) not implemented; default lambda_bce=0.0.
        raise NotImplementedError("lambda_bce > 0 not supported in the Pallas kernel")

    N, M, C = p_preds.shape
    assert N % 2 == 0 and N >= 2, "SKCE_ul pairs consecutive samples; N must be even"
    Nh = N // 2

    # Pairs on the lane axis (one XLA transpose per input — the only wrapper copy).
    pp = jnp.transpose(p_preds.reshape(Nh, 2, M, C), (1, 2, 3, 0))            # (2, M, C, Nh)
    ww = jnp.transpose(weights_l.reshape(Nh, 2, M, 1), (1, 2, 3, 0))          # (2, M, 1, Nh)
    yy = jnp.transpose(y.astype(jnp.int32).reshape(Nh, 2, 1), (1, 2, 0))      # (2, 1, Nh)

    itm = p_preds.dtype.itemsize
    itw = weights_l.dtype.itemsize
    # Sublane-padded VMEM bytes per lane, per buffer (each (rows<=8, TL) tile pads to 8 sublanes).
    bytes_per_lane = (2 * M * _round_up(C, 8) * itm   # p_preds tiles
                      + 2 * M * 8 * itw               # weights tiles
                      + 2 * 8 * 4)                    # label tiles (int32)

    if tile_lanes is None:
        budget = 12 * 1024 * 1024                     # double-buffered block budget (v7x-safe)
        tl = (budget // (2 * bytes_per_lane)) // 128 * 128
        tl = max(128, min(8192, tl))
    else:
        tl = max(128, _round_up(int(tile_lanes), 128))
    if Nh <= tl:
        tl = Nh                                       # single block over the full lane dim (always legal)
    grid = (pl.cdiv(Nh, tl),)                         # ragged last block masked in-kernel; no jnp.pad

    kernel = functools.partial(_skce_kernel, n_pairs=Nh, n_pred=M, n_cls=C,
                               bw=float(bw), use_square=bool(use_square))

    # Generation-aware VMEM limit (v5e/v6e: 128 MiB, v7x: 64 MiB physical).
    tl_pad = _round_up(tl, 128)
    working_set = 2 * bytes_per_lane * tl_pad + 8 * tl_pad * 4
    try:
        cap = int(pltpu.get_tpu_info().vmem_capacity_bytes)
    except Exception:
        cap = 64 * 1024 * 1024
    vmem_limit = int(min(max(32 * 1024 * 1024, working_set + (4 << 20)), (cap * 3) // 4))

    cost = pl.CostEstimate(
        flops=int(Nh * (4 * M * C + 8 * C + 8)),
        transcendentals=int(Nh),
        bytes_accessed=int(N * M * C * itm + N * M * itw + N * 4 + 4),
    )

    out = pl.pallas_call(
        kernel,
        out_shape=jax.ShapeDtypeStruct((1, 1), jnp.float32),
        grid_spec=pltpu.PrefetchScalarGridSpec(
            num_scalar_prefetch=0,
            grid=grid,
            in_specs=[
                pl.BlockSpec((2, M, C, tl), lambda i: (0, 0, 0, i)),
                pl.BlockSpec((2, M, 1, tl), lambda i: (0, 0, 0, i)),
                pl.BlockSpec((2, 1, tl), lambda i: (0, 0, i)),
            ],
            out_specs=pl.BlockSpec((1, 1), lambda i: (0, 0)),
            scratch_shapes=[pltpu.VMEM((1, tl), jnp.float32)],
        ),
        compiler_params=pltpu.CompilerParams(
            dimension_semantics=("arbitrary",),
            vmem_limit_bytes=vmem_limit,
        ),
        cost_estimate=cost,
    )(pp, ww, yy)
    return out[0, 0]


def _skce_loss_ref(p_preds, weights_l, y, *, bw=2.0, use_square=True):
    """Pure-JAX reference for validation."""
    p_bar = jnp.sum(weights_l[:, :, None] * p_preds, axis=1)          # (N, C)
    pe, po = p_bar[0::2], p_bar[1::2]
    oh = jax.nn.one_hot(y, p_preds.shape[-1], dtype=jnp.float32)
    oe, oo = oh[0::2], oh[1::2]
    d = 0.5 * jnp.sum(jnp.abs(pe - po), axis=-1)
    h = jnp.exp(-d / bw) * jnp.sum((oe - pe) * (oo - po), axis=-1)
    loss = jnp.mean(h)
    return loss * loss if use_square else loss


if __name__ == "__main__":
    key = jax.random.PRNGKey(0)
    ks = jax.random.split(key, 6)

    # Small test: single grid step (Nh < 128 -> single full-width block)
    N, M, C = 16, 5, 4
    p_preds = jax.nn.softmax(jax.random.normal(ks[0], (N, M, C), dtype=jnp.float32), axis=-1)
    weights_l = jax.nn.softmax(jax.random.normal(ks[1], (N, M), dtype=jnp.float32), axis=-1)
    y = jax.random.randint(ks[2], (N,), 0, C, dtype=jnp.int32)

    loss = jax.block_until_ready(skce_loss(p_preds, weights_l, y, bw=2.0, use_square=True))
    ref = _skce_loss_ref(p_preds, weights_l, y, bw=2.0, use_square=True)
    assert jnp.allclose(loss, ref, atol=1e-5, rtol=1e-4), (loss, ref)

    # Multi-tile test: exercises grid accumulation + ragged last-block masking
    # (Nh=300, tile_lanes=128 -> 3 grid steps, last block has 44 valid lanes).
    N2, M2, C2 = 600, 5, 4
    p2 = jax.nn.softmax(jax.random.normal(ks[3], (N2, M2, C2), dtype=jnp.float32), axis=-1)
    w2 = jax.nn.softmax(jax.random.normal(ks[4], (N2, M2), dtype=jnp.float32), axis=-1)
    y2 = jax.random.randint(ks[5], (N2,), 0, C2, dtype=jnp.int32)
    loss2 = jax.block_until_ready(
        skce_loss(p2, w2, y2, bw=2.0, use_square=True, tile_lanes=128))
    ref2 = _skce_loss_ref(p2, w2, y2, bw=2.0, use_square=True)
    assert jnp.allclose(loss2, ref2, atol=1e-5, rtol=1e-4), (loss2, ref2)

    print("KERNEL_OK")
</pallas_src>

<mosaic_0001>
module attributes {stable_mosaic.version = 11 : i64} {
  func.func @_skce_kernel(%arg0: i32, %arg1: memref<2x5x4x8xf32, #tpu.memory_space<vmem>>, %arg2: memref<2x5x1x8xf32, #tpu.memory_space<vmem>>, %arg3: memref<2x1x8xi32, #tpu.memory_space<vmem>>, %arg4: memref<1x1xf32, #tpu.memory_space<vmem>>, %arg5: memref<1x8xf32, #tpu.memory_space<vmem>>) attributes {dimension_semantics = [#tpu.dimension_semantics<arbitrary>], iteration_bounds = array<i64: 1>, scalar_prefetch = 0 : i64, scratch_operands = 1 : i64, tpu.core_type = #tpu.core_type<tc>, window_params = [{transform_indices = @transform_0, window_bounds = array<i64: 2, 5, 4, 8>}, {transform_indices = @transform_1, window_bounds = array<i64: 2, 5, 1, 8>}, {transform_indices = @transform_2, window_bounds = array<i64: 2, 1, 8>}, {pipeline_mode = #tpu.pipeline_mode<synchronous>, transform_indices = @transform_3, window_bounds = array<i64: 1, 1>}]} {
    %c0_i32 = arith.constant 0 : i32
    %0 = arith.cmpi eq, %arg0, %c0_i32 : i32
    %1 = arith.extui %0 : i1 to i32
    %c0_i32_0 = arith.constant 0 : i32
    %2 = arith.cmpi ne, %1, %c0_i32_0 : i32
    scf.if %2 {
      %cst_22 = arith.constant 0.000000e+00 : f32
      %81 = vector.broadcast %cst_22 : f32 to vector<1x8xf32>
      %c0_23 = arith.constant 0 : index
      %c0_24 = arith.constant 0 : index
      %82 = vector.load %arg5[%c0_23, %c0_24] : memref<1x8xf32, #tpu.memory_space<vmem>>, vector<1x8xf32>
      tpu.vector_store %arg5[%c0_23, %c0_24], %81 {strides = array<i32>} : memref<1x8xf32, #tpu.memory_space<vmem>>, vector<1x8xf32>,
    } else {
    }
    %c0 = arith.constant 0 : index
    %c0_1 = arith.constant 0 : index
    %c0_2 = arith.constant 0 : index
    %c0_3 = arith.constant 0 : index
    %3 = vector.load %arg1[%c0, %c0_1, %c0_2, %c0_3] : memref<2x5x4x8xf32, #tpu.memory_space<vmem>>, vector<2x5x4x8xf32>
    %c0_4 = arith.constant 0 : index
    %c0_5 = arith.constant 0 : index
    %c0_6 = arith.constant 0 : index
    %c0_7 = arith.constant 0 : index
    %4 = vector.load %arg2[%c0_4, %c0_5, %c0_6, %c0_7] : memref<2x5x1x8xf32, #tpu.memory_space<vmem>>, vector<2x5x1x8xf32>
    %c0_8 = arith.constant 0 : index
    %c0_9 = arith.constant 0 : index
    %c0_10 = arith.constant 0 : index
    %5 = vector.load %arg3[%c0_8, %c0_9, %c0_10] : memref<2x1x8xi32, #tpu.memory_space<vmem>>, vector<2x1x8xi32>
    %6 = vector.extract_strided_slice %4 {offsets = [0, 0, 0, 0], sizes = [2, 1, 1, 8], strides = [1, 1, 1, 1]} : vector<2x5x1x8xf32> to vector<2x1x1x8xf32>
    %7 = vector.shape_cast %6 : vector<2x1x1x8xf32> to vector<2x1x8xf32>
    %8 = vector.extract_strided_slice %3 {offsets = [0, 0, 0, 0], sizes = [2, 1, 4, 8], strides = [1, 1, 1, 1]} : vector<2x5x4x8xf32> to vector<2x1x4x8xf32>
    %9 = vector.shape_cast %8 : vector<2x1x4x8xf32> to vector<2x4x8xf32>
    %10 = vector.broadcast %7 : vector<2x1x8xf32> to vector<2x4x8xf32>
    %11 = arith.mulf %10, %9 : vector<2x4x8xf32>
    %12 = vector.extract_strided_slice %4 {offsets = [0, 1, 0, 0], sizes = [2, 1, 1, 8], strides = [1, 1, 1, 1]} : vector<2x5x1x8xf32> to vector<2x1x1x8xf32>
    %13 = vector.shape_cast %12 : vector<2x1x1x8xf32> to vector<2x1x8xf32>
    %14 = vector.extract_strided_slice %3 {offsets = [0, 1, 0, 0], sizes = [2, 1, 4, 8], strides = [1, 1, 1, 1]} : vector<2x5x4x8xf32> to vector<2x1x4x8xf32>
    %15 = vector.shape_cast %14 : vector<2x1x4x8xf32> to vector<2x4x8xf32>
    %16 = vector.broadcast %13 : vector<2x1x8xf32> to vector<2x4x8xf32>
    %17 = arith.mulf %16, %15 : vector<2x4x8xf32>
    %18 = arith.addf %11, %17 : vector<2x4x8xf32>
    %19 = vector.extract_strided_slice %4 {offsets = [0, 2, 0, 0], sizes = [2, 1, 1, 8], strides = [1, 1, 1, 1]} : vector<2x5x1x8xf32> to vector<2x1x1x8xf32>
    %20 = vector.shape_cast %19 : vector<2x1x1x8xf32> to vector<2x1x8xf32>
    %21 = vector.extract_strided_slice %3 {offsets = [0, 2, 0, 0], sizes = [2, 1, 4, 8], strides = [1, 1, 1, 1]} : vector<2x5x4x8xf32> to vector<2x1x4x8xf32>
    %22 = vector.shape_cast %21 : vector<2x1x4x8xf32> to vector<2x4x8xf32>
    %23 = vector.broadcast %20 : vector<2x1x8xf32> to vector<2x4x8xf32>
    %24 = arith.mulf %23, %22 : vector<2x4x8xf32>
    %25 = arith.addf %18, %24 : vector<2x4x8xf32>
    %26 = vector.extract_strided_slice %4 {offsets = [0, 3, 0, 0], sizes = [2, 1, 1, 8], strides = [1, 1, 1, 1]} : vector<2x5x1x8xf32> to vector<2x1x1x8xf32>
    %27 = vector.shape_cast %26 : vector<2x1x1x8xf32> to vector<2x1x8xf32>
    %28 = vector.extract_strided_slice %3 {offsets = [0, 3, 0, 0], sizes = [2, 1, 4, 8], strides = [1, 1, 1, 1]} : vector<2x5x4x8xf32> to vector<2x1x4x8xf32>
    %29 = vector.shape_cast %28 : vector<2x1x4x8xf32> to vector<2x4x8xf32>
    %30 = vector.broadcast %27 : vector<2x1x8xf32> to vector<2x4x8xf32>
    %31 = arith.mulf %30, %29 : vector<2x4x8xf32>
    %32 = arith.addf %25, %31 : vector<2x4x8xf32>
    %33 = vector.extract_strided_slice %4 {offsets = [0, 4, 0, 0], sizes = [2, 1, 1, 8], strides = [1, 1, 1, 1]} : vector<2x5x1x8xf32> to vector<2x1x1x8xf32>
    %34 = vector.shape_cast %33 : vector<2x1x1x8xf32> to vector<2x1x8xf32>
    %35 = vector.extract_strided_slice %3 {offsets = [0, 4, 0, 0], sizes = [2, 1, 4, 8], strides = [1, 1, 1, 1]} : vector<2x5x4x8xf32> to vector<2x1x4x8xf32>
    %36 = vector.shape_cast %35 : vector<2x1x4x8xf32> to vector<2x4x8xf32>
    %37 = vector.broadcast %34 : vector<2x1x8xf32> to vector<2x4x8xf32>
    %38 = arith.mulf %37, %36 : vector<2x4x8xf32>
    %39 = arith.addf %32, %38 : vector<2x4x8xf32>
    %40 = tpu.iota {dimensions = array<i32: 1>} : vector<2x4x8xi32>
    %41 = vector.broadcast %5 : vector<2x1x8xi32> to vector<2x4x8xi32>
    %42 = arith.cmpi eq, %40, %41 : vector<2x4x8xi32>
    %43 = arith.extui %42 : vector<2x4x8xi1> to vector<2x4x8xi32>
    %44 = arith.sitofp %43 : vector<2x4x8xi32> to vector<2x4x8xf32>
    %45 = vector.extract_strided_slice %39 {offsets = [0, 0, 0], sizes = [1, 4, 8], strides = [1, 1, 1]} : vector<2x4x8xf32> to vector<1x4x8xf32>
    %46 = vector.shape_cast %45 : vector<1x4x8xf32> to vector<4x8xf32>
    %47 = vector.extract_strided_slice %39 {offsets = [1, 0, 0], sizes = [1, 4, 8], strides = [1, 1, 1]} : vector<2x4x8xf32> to vector<1x4x8xf32>
    %48 = vector.shape_cast %47 : vector<1x4x8xf32> to vector<4x8xf32>
    %49 = arith.subf %46, %48 : vector<4x8xf32>
    %50 = math.absf %49 : vector<4x8xf32>
    %cst = arith.constant dense<0.000000e+00> : vector<8xf32>
    %51 = vector.multi_reduction <add>, %50, %cst [0] : vector<4x8xf32> to vector<8xf32>
    %52 = vector.shape_cast %51 : vector<8xf32> to vector<1x8xf32>
    %cst_11 = arith.constant 5.000000e-01 : f32
    %53 = vector.broadcast %cst_11 : f32 to vector<1x8xf32>
    %54 = arith.mulf %53, %52 : vector<1x8xf32>
    %cst_12 = arith.constant -5.000000e-01 : f32
    %55 = vector.broadcast %cst_12 : f32 to vector<1x8xf32>
    %56 = arith.mulf %54, %55 : vector<1x8xf32>
    %57 = math.exp %56 : vector<1x8xf32>
    %58 = arith.subf %44, %39 : vector<2x4x8xf32>
    %59 = vector.extract_strided_slice %58 {offsets = [0, 0, 0], sizes = [1, 4, 8], strides = [1, 1, 1]} : vector<2x4x8xf32> to vector<1x4x8xf32>
    %60 = vector.shape_cast %59 : vector<1x4x8xf32> to vector<4x8xf32>
    %61 = vector.extract_strided_slice %58 {offsets = [1, 0, 0], sizes = [1, 4, 8], strides = [1, 1, 1]} : vector<2x4x8xf32> to vector<1x4x8xf32>
    %62 = vector.shape_cast %61 : vector<1x4x8xf32> to vector<4x8xf32>
    %63 = arith.mulf %60, %62 : vector<4x8xf32>
    %cst_13 = arith.constant dense<0.000000e+00> : vector<8xf32>
    %64 = vector.multi_reduction <add>, %63, %cst_13 [0] : vector<4x8xf32> to vector<8xf32>
    %65 = vector.shape_cast %64 : vector<8xf32> to vector<1x8xf32>
    %66 = arith.mulf %57, %65 : vector<1x8xf32>
    %c8_i32 = arith.constant 8 : i32
    %67 = arith.muli %arg0, %c8_i32 : i32
    %68 = tpu.iota {dimensions = array<i32: 1>} : vector<1x8xi32>
    %69 = vector.broadcast %67 : i32 to vector<1x8xi32>
    %70 = arith.addi %69, %68 : vector<1x8xi32>
    %c8_i32_14 = arith.constant 8 : i32
    %71 = vector.broadcast %c8_i32_14 : i32 to vector<1x8xi32>
    %72 = arith.cmpi slt, %70, %71 : vector<1x8xi32>
    %cst_15 = arith.constant 0.000000e+00 : f32
    %73 = vector.broadcast %cst_15 : f32 to vector<1x8xf32>
    %74 = arith.select %72, %66, %73 : vector<1x8xi1>, vector<1x8xf32>
    %c0_16 = arith.constant 0 : index
    %c0_17 = arith.constant 0 : index
    %75 = vector.load %arg5[%c0_16, %c0_17] : memref<1x8xf32, #tpu.memory_space<vmem>>, vector<1x8xf32>
    %76 = arith.addf %75, %74 : vector<1x8xf32>
    %c0_18 = arith.constant 0 : index
    %c0_19 = arith.constant 0 : index
    %77 = vector.load %arg5[%c0_18, %c0_19] : memref<1x8xf32, #tpu.memory_space<vmem>>, vector<1x8xf32>
    tpu.vector_store %arg5[%c0_18, %c0_19], %76 {strides = array<i32>} : memref<1x8xf32, #tpu.memory_space<vmem>>, vector<1x8xf32>,
    %c0_i32_20 = arith.constant 0 : i32
    %78 = arith.cmpi eq, %arg0, %c0_i32_20 : i32
    %79 = arith.extui %78 : i1 to i32
    %c0_i32_21 = arith.constant 0 : i32
    %80 = arith.cmpi ne, %79, %c0_i32_21 : i32
    scf.if %80 {
      %c0_22 = arith.constant 0 : index
      %c0_23 = arith.constant 0 : index
      %81 = vector.load %arg5[%c0_22, %c0_23] : memref<1x8xf32, #tpu.memory_space<vmem>>, vector<1x8xf32>
      %cst_24 = arith.constant dense<0.000000e+00> : vector<1xf32>
      %82 = vector.multi_reduction <add>, %81, %cst_24 [1] : vector<1x8xf32> to vector<1xf32>
      %83 = vector.shape_cast %82 : vector<1xf32> to vector<1x1xf32>
      %cst_25 = arith.constant 1.250000e-01 : f32
      %84 = vector.broadcast %cst_25 : f32 to vector<1x1xf32>
      %85 = arith.mulf %83, %84 : vector<1x1xf32>
      %86 = arith.mulf %85, %85 : vector<1x1xf32>
      %c0_26 = arith.constant 0 : index
      %c0_27 = arith.constant 0 : index
      %87 = vector.load %arg4[%c0_26, %c0_27] : memref<1x1xf32, #tpu.memory_space<vmem>>, vector<1x1xf32>
      tpu.vector_store %arg4[%c0_26, %c0_27], %86 {strides = array<i32>} : memref<1x1xf32, #tpu.memory_space<vmem>>, vector<1x1xf32>,
    } else {
    }
    return
  }
  func.func @transform_0(%arg0: i32) -> (i32, i32, i32, i32) {
    %c0_i32 = arith.constant 0 : i32
    %c0_i32_0 = arith.constant 0 : i32
    %c0_i32_1 = arith.constant 0 : i32
    %c0_i32_2 = arith.constant 0 : i32
    return %c0_i32, %c0_i32_0, %c0_i32_1, %arg0 : i32, i32, i32, i32
  }
  func.func @transform_1(%arg0: i32) -> (i32, i32, i32, i32) {
    %c0_i32 = arith.constant 0 : i32
    %c0_i32_0 = arith.constant 0 : i32
    %c0_i32_1 = arith.constant 0 : i32
    %c0_i32_2 = arith.constant 0 : i32
    return %c0_i32, %c0_i32_0, %c0_i32_1, %arg0 : i32, i32, i32, i32
  }
  func.func @transform_2(%arg0: i32) -> (i32, i32, i32) {
    %c0_i32 = arith.constant 0 : i32
    %c0_i32_0 = arith.constant 0 : i32
    %c0_i32_1 = arith.constant 0 : i32
    return %c0_i32, %c0_i32_0, %arg0 : i32, i32, i32
  }
  func.func @transform_3(%arg0: i32) -> (i32, i32) {
    %c0_i32 = arith.constant 0 : i32
    %c0_i32_0 = arith.constant 0 : i32
    %c0_i32_1 = arith.constant 0 : i32
    return %c0_i32, %c0_i32_0 : i32, i32
  }
}

</mosaic_0001>

<llo_original>
// kernel: tpu_custom_call.1
$region0: #{tpu_custom_call.1}
  #allocation0 [shape = 'u32[]', space=smem, size = 0x4, offset = 0x4, fixed_abs, tag = 'smem constant byte address 0x4 - core index']
  #allocation1 [shape = 'u32[144,128]{1,0:T(1,128)}', space=vmem, size = 0x12000, scoped, tag = 'internal scratch']
  #allocation2 [shape = 'f32[1,8]{1,0:T(1,128)}', space=vmem, size = 0x200, scoped, tag = 'scratch operand']
  %s0 = inlined_call_operand.hbm [shape: f32[2,5,4,8], index: 0, kind: input, shape index: {}]
  %s1 = inlined_call_operand.hbm [shape: f32[2,5,1,8], index: 1, kind: input, shape index: {}]
  %s2 = inlined_call_operand.vmem [shape: s32[2,1,8], index: 2, kind: input, shape index: {}]
  %s3 = inlined_call_operand.hbm [shape: f32[1,1], index: 3, kind: output, shape index: {}]
  %s4 = sld [smem:[#allocation0]]
  $region38: #{tpu_custom_call.1} parent=0
    _
  %s6 = ssub.s32 1, %s4
  %s7 = scalar_select 0, %s6, %s4
  $region1: #{tpu_custom_call.1} parent=0
    #allocation3 [shape = 'u8[20480]{0}', space=vmem, size = 0x5000, scoped, tag = 'input window, operand 0, single buffered']
    #allocation4 [shape = 's32[1]{0}', space=sflag, size = 0x4, scoped, tag = 'scoped memory for tpu_custom_call.1']
    #allocation5 [shape = 's32[1]{0}', space=sflag, size = 0x4, scoped, tag = 'scoped memory for tpu_custom_call.1']
    #allocation6 [shape = 'u8[5120]{0}', space=vmem, size = 0x1400, scoped, tag = 'input window, operand 1, single buffered']
    #allocation7 [shape = 's32[1]{0}', space=sflag, size = 0x4, scoped, tag = 'scoped memory for tpu_custom_call.1']
    #allocation8 [shape = 'u8[512]{0}', space=vmem, size = 0x400, scoped, tag = 'output window, operand 0, single buffered']
    %8 = vsyncpa [#allocation4], 0
    %9 = vsyncpa [#allocation7], 0
    %10 = vsyncpa [#allocation5], 0
    // Predicated region
    $region2: #{tpu_custom_call.1} parent=1 // pred_check
      _
    $region3: #{tpu_custom_call.1} parent=1 // pred_check_branch
      %12 = sbr.rel (0) target = $region5
    $region4: #{tpu_custom_call.1} parent=1 // pred_region
      %s14 = ssub.s32 640, 640
      %15 = vsyncadd [#allocation4], %s14
      %s16 = sshll.u32 [#allocation3], 4
      %s17 = int_to_ptr.vmem [resolvable:$true] %s16
      %22 = dma.hbm_to_vmem [thread:$0]  %s0, 640, %s17, [#allocation4], 64, 64, 4
    $region5: #{tpu_custom_call.1} parent=1 // pred_fallthru
      _
    // Predicated region
    $region6: #{tpu_custom_call.1} parent=1 // pred_check
      _
    $region7: #{tpu_custom_call.1} parent=1 // pred_check_branch
      %24 = sbr.rel (0) target = $region9
    $region8: #{tpu_custom_call.1} parent=1 // pred_region
      %s26 = ssub.s32 160, 160
      %27 = vsyncadd [#allocation7], %s26
      %s28 = sshll.u32 [#allocation6], 4
      %s29 = int_to_ptr.vmem [resolvable:$true] %s28
      %34 = dma.hbm_to_vmem [thread:$0]  %s1, 160, %s29, [#allocation7], 16, 16, 1
    $region9: #{tpu_custom_call.1} parent=1 // pred_fallthru
      _
    // Predicated region
    $region10: #{tpu_custom_call.1} parent=1 // pred_check
      _
    $region11: #{tpu_custom_call.1} parent=1 // pred_check_branch
      %36 = sbr.rel (0) target = $region13
    $region12: #{tpu_custom_call.1} parent=1 // pred_region
      _
    $region13: #{tpu_custom_call.1} parent=1 // pred_fallthru
      _
    // Predicated region
    $region14: #{tpu_custom_call.1} parent=1 // pred_check
      _
    $region15: #{tpu_custom_call.1} parent=1 // pred_check_branch
      %38 = sbr.rel (0) target = $region17
    $region16: #{tpu_custom_call.1} parent=1 // pred_region
      %39 = dma.done [#allocation4], 640
    $region17: #{tpu_custom_call.1} parent=1 // pred_fallthru
      _
    // Predicated region
    $region18: #{tpu_custom_call.1} parent=1 // pred_check
      _
    $region19: #{tpu_custom_call.1} parent=1 // pred_check_branch
      %41 = sbr.rel (0) target = $region21
    $region20: #{tpu_custom_call.1} parent=1 // pred_region
      %42 = dma.done [#allocation7], 160
    $region21: #{tpu_custom_call.1} parent=1 // pred_fallthru
      _
    %p43 = scmp.eq.s32.totalorder 0, 0
    // Predicated region
    $region22: #{tpu_custom_call.1} parent=1 // pred_check
      %p44 = pneg %p43
    $region23: #{tpu_custom_call.1} parent=1 // pred_check_branch
      %46 = sbr.rel (%p44) target = $region25
    $region24: #{tpu_custom_call.1} parent=1 // pred_region
      %vm47 = vcmask 57344
      %48 = vst.msk [vmem:[#allocation2] sm:$0x1] %vm47, 0.0
    $region25: #{tpu_custom_call.1} parent=1 // pred_fallthru
      _
    %v49 = vld [vmem:[#allocation3] sm:$0xf]
    %v50 = vld [vmem:[#allocation3 + $0x4] sm:$0xf]
    %v51 = vld [vmem:[#allocation3 + $0x8] sm:$0xf]
    %v52 = vld [vmem:[#allocation3 + $0xc] sm:$0xf]
    %v53 = vld [vmem:[#allocation3 + $0x10] sm:$0xf]
    %v54 = vld [vmem:[#allocation3 + $0x14] sm:$0xf]
    %v55 = vld [vmem:[#allocation3 + $0x18] sm:$0xf]
    %v56 = vld [vmem:[#allocation3 + $0x1c] sm:$0xf]
    %v57 = vld [vmem:[#allocation3 + $0x20] sm:$0xf]
    %v58 = vld [vmem:[#allocation3 + $0x24] sm:$0xf]
    %v59 = vld [vmem:[#allocation6] sm:$0x1]
    %v60 = vld [vmem:[#allocation6 + $0x1] sm:$0x1]
    %v61 = vld [vmem:[#allocation6 + $0x2] sm:$0x1]
    %v62 = vld [vmem:[#allocation6 + $0x3] sm:$0x1]
    %v63 = vld [vmem:[#allocation6 + $0x4] sm:$0x1]
    %v64 = vld [vmem:[#allocation6 + $0x5] sm:$0x1]
    %v65 = vld [vmem:[#allocation6 + $0x6] sm:$0x1]
    %v66 = vld [vmem:[#allocation6 + $0x7] sm:$0x1]
    %v67 = vld [vmem:[#allocation6 + $0x8] sm:$0x1]
    %v68 = vld [vmem:[#allocation6 + $0x9] sm:$0x1]
    %v69 = vld [vmem:[%s2] sm:$0x1]
    %v70 = vld [vmem:[%s2 + $0x1] sm:$0x1]
    %v73 = vlaneseq
    %v74 = vshrl.u32 %v73, 7
    %v75 = vsub.s32 0, %v74
    %v76 = vrot.slane %v59, %v75
    %v77 = vlaneseq
    %v78 = vshrl.u32 %v77, 7
    %v79 = vsub.s32 0, %v78
    %v80 = vrot.slane %v64, %v79
    %v83 = vmul.f32 %v76, %v49
    %v84 = vmul.f32 %v80, %v54
    %v87 = vlaneseq
    %v88 = vshrl.u32 %v87, 7
    %v89 = vsub.s32 0, %v88
    %v90 = vrot.slane %v60, %v89
    %v91 = vlaneseq
    %v92 = vshrl.u32 %v91, 7
    %v93 = vsub.s32 0, %v92
    %v94 = vrot.slane %v65, %v93
    %v97 = vmul.f32 %v90, %v50
    %v98 = vmul.f32 %v94, %v55
    %v99 = vadd.f32 %v83, %v97
    %v100 = vadd.f32 %v84, %v98
    %v103 = vlaneseq
    %v104 = vshrl.u32 %v103, 7
    %v105 = vsub.s32 0, %v104
    %v106 = vrot.slane %v61, %v105
    %v107 = vlaneseq
    %v108 = vshrl.u32 %v107, 7
    %v109 = vsub.s32 0, %v108
    %v110 = vrot.slane %v66, %v109
    %v113 = vmul.f32 %v106, %v51
    %v114 = vmul.f32 %v110, %v56
    %v115 = vadd.f32 %v99, %v113
    %v116 = vadd.f32 %v100, %v114
    %v119 = vlaneseq
    %v120 = vshrl.u32 %v119, 7
    %v121 = vsub.s32 0, %v120
    %v122 = vrot.slane %v62, %v121
    %v123 = vlaneseq
    %v124 = vshrl.u32 %v123, 7
    %v125 = vsub.s32 0, %v124
    %v126 = vrot.slane %v67, %v125
    %v129 = vmul.f32 %v122, %v52
    %v130 = vmul.f32 %v126, %v57
    %v131 = vadd.f32 %v115, %v129
    %v132 = vadd.f32 %v116, %v130
    %v135 = vlaneseq
    %v136 = vshrl.u32 %v135, 7
    %v137 = vsub.s32 0, %v136
    %v138 = vrot.slane %v63, %v137
    %v139 = vlaneseq
    %v140 = vshrl.u32 %v139, 7
    %v141 = vsub.s32 0, %v140
    %v142 = vrot.slane %v68, %v141
    %v145 = vmul.f32 %v138, %v53
    %v146 = vmul.f32 %v142, %v58
    %v147 = vadd.f32 %v131, %v145
    %v148 = vadd.f32 %v132, %v146
    %v149 = vlaneseq
    %v150 = vshrl.u32 %v149, 7
    %v151 = vlaneseq
    %v152 = vshrl.u32 %v151, 7
    %v153 = vsub.s32 0, %v152
    %v154 = vrot.slane %v69, %v153
    %v155 = vlaneseq
    %v156 = vshrl.u32 %v155, 7
    %v157 = vsub.s32 0, %v156
    %v158 = vrot.slane %v70, %v157
    %vm159 = vcmp.eq.s32.totalorder %v150, %v154
    %vm160 = vcmp.eq.s32.totalorder %v150, %v158
    %v161 = vsel %vm159, 1, 0
    %v162 = vsel %vm160, 1, 0
    %v163 = vcvt.s32.f32 %v161
    %v164 = vcvt.s32.f32 %v162
    %v165 = vsub.f32 %v147, %v148
    %v166 = vand.u32 2147483647, %v165
    %vm167 = vcmask 60416
    %v168 = vsel %vm167, %v166, 0.0
    %v169 = vrot.slane %v168, 4
    %v170 = vadd.f32 %v168, %v169
    %v171 = vrot.slane %v170, 2
    %v172 = vadd.f32 %v170, %v171
    %v173 = vrot.slane %v172, 1
    %v174 = vadd.f32 %v172, %v173
    %v175 = vmul.f32 %v174, 0.5
    %v176 = vmul.f32 %v175, -0.5
    %v177 = vmul.f32 %v176, 1.442695
    %v178 = vpow.pop %v177
    %v179 = vsub.f32 %v163, %v147
    %v180 = vsub.f32 %v164, %v148
    %v181 = vmul.f32 %v179, %v180
    %v182 = vsel %vm167, %v181, 0.0
    %v183 = vrot.slane %v182, 4
    %v184 = vadd.f32 %v182, %v183
    %v185 = vrot.slane %v184, 2
    %v186 = vadd.f32 %v184, %v185
    %v187 = vrot.slane %v186, 1
    %v188 = vadd.f32 %v186, %v187
    %v189 = vmul.f32 %v178, %v188
    %s190 = smul.u32 0, 8
    %v191 = vlaneseq
    %v192 = vand.u32 %v191, 127
    %v193 = vstv %s190
    %v194 = vadd.s32 %v193, %v192
    %vm195 = vcmp.lt.s32.totalorder %v194, 8
    %v196 = vsel %vm195, %v189, 0.0
    %v197 = vld [vmem:[#allocation2] sm:$0x1]
    %v198 = vadd.f32 %v197, %v196
    %vm199 = vcmask 57344
    %200 = vst.msk [vmem:[#allocation2] sm:$0x1] %vm199, %v198
    // Predicated region
    $region26: #{tpu_custom_call.1} parent=1 // pred_check
      %p201 = pneg %p43
    $region27: #{tpu_custom_call.1} parent=1 // pred_check_branch
      %203 = sbr.rel (%p201) target = $region29
    $region28: #{tpu_custom_call.1} parent=1 // pred_region
      %v204 = vld [vmem:[#allocation2] sm:$0x1]
      %v205 = vsel %vm199, %v204, 0.0
      %206 = vadd.xlane.f32.xlu0 %v205
      %v207 = vpop.xlane.xlu0 %206
      %v208 = vmul.f32 %v207, 0.125
      %v209 = vmul.f32 %v208, %v208
      %vm210 = vcmask 0
      %211 = vst.msk [vmem:[#allocation8] sm:$0x1] %vm210, %v209
    $region29: #{tpu_custom_call.1} parent=1 // pred_fallthru
      _
    // Predicated region
    $region30: #{tpu_custom_call.1} parent=1 // pred_check
      _
    $region31: #{tpu_custom_call.1} parent=1 // pred_check_branch
      %213 = sbr.rel (0) target = $region33
    $region32: #{tpu_custom_call.1} parent=1 // pred_region
      %s215 = ssub.s32 16, 16
      %216 = vsyncadd [#allocation5], %s215
      %s218 = sshll.u32 [#allocation8], 4
      %s219 = int_to_ptr.vmem [resolvable:$true] %s218
      %221 = dma.vmem_to_hbm [thread:$0]  %s219, 16, %s3, [#allocation5]
    $region33: #{tpu_custom_call.1} parent=1 // pred_fallthru
      _
    // Predicated region
    $region34: #{tpu_custom_call.1} parent=1 // pred_check
      _
    $region35: #{tpu_custom_call.1} parent=1 // pred_check_branch
      %223 = sbr.rel (0) target = $region37
    $region36: #{tpu_custom_call.1} parent=1 // pred_region
      %224 = dma.done [#allocation5], 16
    $region37: #{tpu_custom_call.1} parent=1 // pred_fallthru
      _
    %225 = vsyncpa [#allocation4], 1
    %226 = vsyncpa [#allocation7], 1
    %227 = vsyncpa [#allocation5], 1

</llo_original>
